<compile_context>
chip_gen: v7x
topology: tpu7x:2x2x1
jax: 0.10.0
libtpu: 0.0.40
codegen_flags: <defaults>
</compile_context>

<pallas_src>
import jax
import jax.numpy as jnp
import numpy as np
from jax.experimental import pallas as pl
from jax.experimental.pallas import tpu as pltpu

_LANES = 128
_SUBLANES = 8
_TR_TARGET = 1024  # rows of 128 lanes per grid step (~8 MiB total VMEM working set)


def _round_up(x, m):
    return (x + m - 1) // m * m


def _stats_kernel(pred_ref, tgt_ref, w_ref, neg_ref, cnt_ref, sum_ref,
                  cpos_acc, cneg_acc, wpos_acc, lwpos_acc):
    """Streaming elementwise pass.

    pred_ref, tgt_ref : (2, TR, 128) VMEM blocks
    w_ref             : (TR, 128)    VMEM block
    neg_ref (out)     : (TR, 128)    per-pixel loss where weight == 0, else 0
    cnt_ref (out)     : (2,) int32   SMEM  [sumPos, sumNeg]
    sum_ref (out)     : (2,) f32     SMEM  [sum(w|pos), sum(loss*w|pos)]
    *_acc (scratch)   : (TR, 128)    VMEM elementwise accumulators
    """
    b = pl.program_id(0)
    i = pl.program_id(1)
    first = (b == 0) & (i == 0)
    last = (b == pl.num_programs(0) - 1) & (i == pl.num_programs(1) - 1)

    @pl.when(first)
    def _():
        cpos_acc[...] = jnp.zeros_like(cpos_acc)
        cneg_acc[...] = jnp.zeros_like(cneg_acc)
        wpos_acc[...] = jnp.zeros_like(wpos_acc)
        lwpos_acc[...] = jnp.zeros_like(lwpos_acc)

    d0 = pred_ref[0] - tgt_ref[0]
    d1 = pred_ref[1] - tgt_ref[1]
    loss = d0 * d0 + d1 * d1          # == mse(reduction='none').sum(dim=1) per pixel
    w = w_ref[...]
    pos = w > 0.0
    neg = w == 0.0                    # padded pixels have w == -1 -> neither

    neg_ref[...] = jnp.where(neg, loss, 0.0)

    # Pure-VPU elementwise accumulation each step; the cross-lane (XLU) reduce
    # and the SMEM stores happen only once, on the last grid step.
    cpos_acc[...] += pos.astype(jnp.int32)
    cneg_acc[...] += neg.astype(jnp.int32)
    wpos_acc[...] += jnp.where(pos, w, 0.0)
    lwpos_acc[...] += jnp.where(pos, loss * w, 0.0)

    @pl.when(last)
    def _():
        cnt_ref[0] = jnp.sum(cpos_acc[...])
        cnt_ref[1] = jnp.sum(cneg_acc[...])
        sum_ref[0] = jnp.sum(wpos_acc[...])
        sum_ref[1] = jnp.sum(lwpos_acc[...])


def _topk_sum_kernel(start_ref, sorted_ref, out_ref, acc_ref):
    """Sum of elements with flat index >= start of an ascending-sorted array.

    start_ref  : (1,) int32  scalar-prefetch (= total - k)
    sorted_ref : (TR, 128)   VMEM block of the ascending-sorted negative losses
    out_ref    : (1,) f32    SMEM
    acc_ref    : (TR, 128)   f32 VMEM scratch accumulator
    """
    i = pl.program_id(0)

    @pl.when(i == 0)
    def _():
        acc_ref[...] = jnp.zeros_like(acc_ref)

    trf, lanes = acc_ref.shape
    row = jax.lax.broadcasted_iota(jnp.int32, (trf, lanes), 0)
    col = jax.lax.broadcasted_iota(jnp.int32, (trf, lanes), 1)
    gidx = (i * trf + row) * lanes + col
    keep = gidx >= start_ref[0]
    acc_ref[...] += jnp.where(keep, sorted_ref[...], 0.0)

    @pl.when(i == pl.num_programs(0) - 1)
    def _():
        out_ref[0] = jnp.sum(acc_ref[...])


def text_loss(predict, vec_mask, weight, negative_ratio):
    BS, C, H, W = predict.shape
    assert C == 2, "reference code is only shape-consistent with 2 channels"
    HW = H * W

    rows_raw = -(-HW // _LANES)                       # ceil(HW / 128)
    TR = min(_TR_TARGET, _round_up(rows_raw, _SUBLANES))
    rows = _round_up(rows_raw, TR)
    HWp = rows * _LANES
    pad = HWp - HW

    # No NHWC permute / channel transpose: ordering only has to be consistent
    # between pred / tgt / weight, and NCHW is already channel-major and
    # pixel-dense.  These reshapes are free; padding only happens if needed.
    predf = predict.astype(jnp.float32).reshape(BS, 2, HW)
    tgtf = vec_mask.astype(jnp.float32).reshape(BS, 2, HW)
    wf = weight.astype(jnp.float32).reshape(BS, HW)
    if pad:
        predf = jnp.pad(predf, ((0, 0), (0, 0), (0, pad)))
        tgtf = jnp.pad(tgtf, ((0, 0), (0, 0), (0, pad)))
        wf = jnp.pad(wf, ((0, 0), (0, pad)), constant_values=-1.0)
    pred4 = predf.reshape(BS, 2, rows, _LANES)
    tgt4 = tgtf.reshape(BS, 2, rows, _LANES)
    w3 = wf.reshape(BS, rows, _LANES)

    row_blocks = rows // TR

    # TODO(synk): for v7x megacore, emit per-block partial stats instead of a
    # cross-step accumulator so these grid axes can be marked "parallel".
    neg3, counts, sums = pl.pallas_call(
        _stats_kernel,
        out_shape=(
            jax.ShapeDtypeStruct((BS, rows, _LANES), jnp.float32),
            jax.ShapeDtypeStruct((2,), jnp.int32),
            jax.ShapeDtypeStruct((2,), jnp.float32),
        ),
        grid_spec=pltpu.PrefetchScalarGridSpec(
            num_scalar_prefetch=0,
            grid=(BS, row_blocks),
            in_specs=[
                pl.BlockSpec((None, 2, TR, _LANES), lambda b, i: (b, 0, i, 0)),
                pl.BlockSpec((None, 2, TR, _LANES), lambda b, i: (b, 0, i, 0)),
                pl.BlockSpec((None, TR, _LANES), lambda b, i: (b, i, 0)),
            ],
            out_specs=(
                pl.BlockSpec((None, TR, _LANES), lambda b, i: (b, i, 0)),
                pl.BlockSpec(memory_space=pltpu.MemorySpace.SMEM),
                pl.BlockSpec(memory_space=pltpu.MemorySpace.SMEM),
            ),
            scratch_shapes=[
                pltpu.VMEM((TR, _LANES), jnp.int32),
                pltpu.VMEM((TR, _LANES), jnp.int32),
                pltpu.VMEM((TR, _LANES), jnp.float32),
                pltpu.VMEM((TR, _LANES), jnp.float32),
            ],
        ),
        compiler_params=pltpu.CompilerParams(
            dimension_semantics=("arbitrary", "arbitrary"),
            vmem_limit_bytes=32 * 1024 * 1024,
        ),
    )(pred4, tgt4, w3)

    sum_pos = counts[0]
    sum_neg = counts[1]
    sum_w_pos = sums[0]
    sum_lw_pos = sums[1]

    # sumhardNeg = min(negative_ratio * sumPos, sumNeg); if sumPos == 0 -> 1
    k = jnp.minimum(jnp.int32(negative_ratio) * sum_pos, sum_neg)
    k = jnp.where(sum_pos == 0, jnp.int32(1), k)

    # TODO(synk): replace the O(N log N) XLA sort with a streaming Pallas
    # threshold/histogram top-k sum (needs exact-k tie handling at threshold).
    # Ascending sort (no reverse pass); the tiled kernel sums the k largest.
    total = BS * rows * _LANES
    sorted_asc = jnp.sort(neg3.reshape(-1)).reshape(BS * rows, _LANES)
    start = (jnp.int32(total) - k).reshape(1)

    top = pl.pallas_call(
        _topk_sum_kernel,
        out_shape=jax.ShapeDtypeStruct((1,), jnp.float32),
        grid_spec=pltpu.PrefetchScalarGridSpec(
            num_scalar_prefetch=1,
            grid=(BS * rows // TR,),
            in_specs=[pl.BlockSpec((TR, _LANES), lambda i, start: (i, 0))],
            out_specs=pl.BlockSpec(memory_space=pltpu.MemorySpace.SMEM),
            scratch_shapes=[pltpu.VMEM((TR, _LANES), jnp.float32)],
        ),
        compiler_params=pltpu.CompilerParams(
            dimension_semantics=("arbitrary",),
        ),
    )(start, sorted_asc)

    return (sum_lw_pos + top[0]) / (sum_w_pos + k.astype(jnp.float32))


def _reference(predict, vec_mask, weight, negative_ratio):
    pred = np.transpose(np.asarray(predict, np.float64), (0, 2, 3, 1)).reshape(-1, 2)
    tgt = np.transpose(np.asarray(vec_mask, np.float64), (0, 2, 3, 1)).reshape(-1, 2)
    w = np.asarray(weight, np.float64).reshape(-1)
    pos = w > 0
    neg = w == 0
    sum_pos = int(pos.sum())
    sum_neg = int(neg.sum())
    k = min(negative_ratio * sum_pos, sum_neg)
    if sum_pos == 0:
        k = 1
    loss_pos = ((pred[pos] - tgt[pos]) ** 2).sum(axis=1)
    loss_neg = ((pred[neg] - tgt[neg]) ** 2).sum(axis=1)
    loss_neg = np.sort(loss_neg)[::-1][:k]
    w_pos = w[pos]
    return ((loss_pos * w_pos).sum() + loss_neg.sum()) / (w_pos.sum() + k)


if __name__ == "__main__":
    key = jax.random.PRNGKey(0)
    k1, k2, k3 = jax.random.split(key, 3)
    BS, C, H, W = 2, 2, 16, 16
    predict = jax.random.normal(k1, (BS, C, H, W), dtype=jnp.float32)
    vec_mask = jax.random.normal(k2, (BS, C, H, W), dtype=jnp.float32)
    wraw = jax.random.uniform(k3, (BS, H, W), dtype=jnp.float32)
    weight = jnp.where(wraw > 0.5, wraw, 0.0)  # mix of positive weights and zeros
    negative_ratio = 3

    loss = text_loss(predict, vec_mask, weight, negative_ratio)
    loss = jax.block_until_ready(loss)

    ref = _reference(predict, vec_mask, weight, negative_ratio)
    assert abs(float(loss) - float(ref)) <= 1e-4 * max(1.0, abs(float(ref))), (
        float(loss), float(ref))
    print("KERNEL_OK")
</pallas_src>

<mosaic_0001>
module attributes {stable_mosaic.version = 11 : i64} {
  func.func @_stats_kernel(%arg0: i32, %arg1: i32, %arg2: memref<1x2x8x128xf32, #tpu.memory_space<vmem>>, %arg3: memref<1x2x8x128xf32, #tpu.memory_space<vmem>>, %arg4: memref<1x8x128xf32, #tpu.memory_space<vmem>>, %arg5: memref<1x8x128xf32, #tpu.memory_space<vmem>>, %arg6: memref<2xi32, #tpu.memory_space<smem>>, %arg7: memref<2xf32, #tpu.memory_space<smem>>, %arg8: memref<8x128xi32, #tpu.memory_space<vmem>>, %arg9: memref<8x128xi32, #tpu.memory_space<vmem>>, %arg10: memref<8x128xf32, #tpu.memory_space<vmem>>, %arg11: memref<8x128xf32, #tpu.memory_space<vmem>>) attributes {dimension_semantics = [#tpu.dimension_semantics<arbitrary>, #tpu.dimension_semantics<arbitrary>], iteration_bounds = array<i64: 2, 1>, scalar_prefetch = 0 : i64, scratch_operands = 4 : i64, tpu.core_type = #tpu.core_type<tc>, window_params = [{transform_indices = @transform_0, window_bounds = array<i64: 1, 2, 8, 128>}, {transform_indices = @transform_1, window_bounds = array<i64: 1, 2, 8, 128>}, {transform_indices = @transform_2, window_bounds = array<i64: 1, 8, 128>}, {transform_indices = @transform_3, window_bounds = array<i64: 1, 8, 128>}, {transform_indices = @transform_4, window_bounds = array<i64: 2>}, {transform_indices = @transform_5, window_bounds = array<i64: 2>}]} {
    %c0_i32 = arith.constant 0 : i32
    %0 = arith.cmpi eq, %arg0, %c0_i32 : i32
    %c0_i32_0 = arith.constant 0 : i32
    %1 = arith.cmpi eq, %arg1, %c0_i32_0 : i32
    %2 = arith.andi %0, %1 : i1
    %c1_i32 = arith.constant 1 : i32
    %3 = arith.cmpi eq, %arg0, %c1_i32 : i32
    %c0_i32_1 = arith.constant 0 : i32
    %4 = arith.cmpi eq, %arg1, %c0_i32_1 : i32
    %5 = arith.andi %3, %4 : i1
    %6 = arith.extui %2 : i1 to i32
    %c0_i32_2 = arith.constant 0 : i32
    %7 = arith.cmpi ne, %6, %c0_i32_2 : i32
    scf.if %7 {
      %c0_i32_44 = arith.constant 0 : i32
      %53 = vector.broadcast %c0_i32_44 : i32 to vector<8x128xi32>
      %c0_45 = arith.constant 0 : index
      %c0_46 = arith.constant 0 : index
      %54 = vector.load %arg8[%c0_45, %c0_46] : memref<8x128xi32, #tpu.memory_space<vmem>>, vector<8x128xi32>
      tpu.vector_store %arg8[%c0_45, %c0_46], %53 {strides = array<i32>} : memref<8x128xi32, #tpu.memory_space<vmem>>, vector<8x128xi32>,
      %c0_i32_47 = arith.constant 0 : i32
      %55 = vector.broadcast %c0_i32_47 : i32 to vector<8x128xi32>
      %c0_48 = arith.constant 0 : index
      %c0_49 = arith.constant 0 : index
      %56 = vector.load %arg9[%c0_48, %c0_49] : memref<8x128xi32, #tpu.memory_space<vmem>>, vector<8x128xi32>
      tpu.vector_store %arg9[%c0_48, %c0_49], %55 {strides = array<i32>} : memref<8x128xi32, #tpu.memory_space<vmem>>, vector<8x128xi32>,
      %cst_50 = arith.constant 0.000000e+00 : f32
      %57 = vector.broadcast %cst_50 : f32 to vector<8x128xf32>
      %c0_51 = arith.constant 0 : index
      %c0_52 = arith.constant 0 : index
      %58 = vector.load %arg10[%c0_51, %c0_52] : memref<8x128xf32, #tpu.memory_space<vmem>>, vector<8x128xf32>
      tpu.vector_store %arg10[%c0_51, %c0_52], %57 {strides = array<i32>} : memref<8x128xf32, #tpu.memory_space<vmem>>, vector<8x128xf32>,
      %cst_53 = arith.constant 0.000000e+00 : f32
      %59 = vector.broadcast %cst_53 : f32 to vector<8x128xf32>
      %c0_54 = arith.constant 0 : index
      %c0_55 = arith.constant 0 : index
      %60 = vector.load %arg11[%c0_54, %c0_55] : memref<8x128xf32, #tpu.memory_space<vmem>>, vector<8x128xf32>
      tpu.vector_store %arg11[%c0_54, %c0_55], %59 {strides = array<i32>} : memref<8x128xf32, #tpu.memory_space<vmem>>, vector<8x128xf32>,
    } else {
    }
    %c0 = arith.constant 0 : index
    %c0_3 = arith.constant 0 : index
    %c0_4 = arith.constant 0 : index
    %c0_5 = arith.constant 0 : index
    %8 = vector.load %arg2[%c0, %c0_3, %c0_4, %c0_5] : memref<1x2x8x128xf32, #tpu.memory_space<vmem>>, vector<1x1x8x128xf32>
    %9 = vector.shape_cast %8 : vector<1x1x8x128xf32> to vector<8x128xf32>
    %c0_6 = arith.constant 0 : index
    %c0_7 = arith.constant 0 : index
    %c0_8 = arith.constant 0 : index
    %c0_9 = arith.constant 0 : index
    %10 = vector.load %arg3[%c0_6, %c0_7, %c0_8, %c0_9] : memref<1x2x8x128xf32, #tpu.memory_space<vmem>>, vector<1x1x8x128xf32>
    %11 = vector.shape_cast %10 : vector<1x1x8x128xf32> to vector<8x128xf32>
    %12 = arith.subf %9, %11 : vector<8x128xf32>
    %c0_10 = arith.constant 0 : index
    %c1 = arith.constant 1 : index
    %c0_11 = arith.constant 0 : index
    %c0_12 = arith.constant 0 : index
    %13 = vector.load %arg2[%c0_10, %c1, %c0_11, %c0_12] : memref<1x2x8x128xf32, #tpu.memory_space<vmem>>, vector<1x1x8x128xf32>
    %14 = vector.shape_cast %13 : vector<1x1x8x128xf32> to vector<8x128xf32>
    %c0_13 = arith.constant 0 : index
    %c1_14 = arith.constant 1 : index
    %c0_15 = arith.constant 0 : index
    %c0_16 = arith.constant 0 : index
    %15 = vector.load %arg3[%c0_13, %c1_14, %c0_15, %c0_16] : memref<1x2x8x128xf32, #tpu.memory_space<vmem>>, vector<1x1x8x128xf32>
    %16 = vector.shape_cast %15 : vector<1x1x8x128xf32> to vector<8x128xf32>
    %17 = arith.subf %14, %16 : vector<8x128xf32>
    %18 = arith.mulf %12, %12 : vector<8x128xf32>
    %19 = arith.mulf %17, %17 : vector<8x128xf32>
    %20 = arith.addf %18, %19 : vector<8x128xf32>
    %c0_17 = arith.constant 0 : index
    %c0_18 = arith.constant 0 : index
    %c0_19 = arith.constant 0 : index
    %21 = vector.load %arg4[%c0_17, %c0_18, %c0_19] : memref<1x8x128xf32, #tpu.memory_space<vmem>>, vector<1x8x128xf32>
    %22 = vector.shape_cast %21 : vector<1x8x128xf32> to vector<8x128xf32>
    %cst = arith.constant 0.000000e+00 : f32
    %23 = vector.broadcast %cst : f32 to vector<8x128xf32>
    %24 = arith.cmpf ogt, %22, %23 : vector<8x128xf32>
    %cst_20 = arith.constant 0.000000e+00 : f32
    %25 = vector.broadcast %cst_20 : f32 to vector<8x128xf32>
    %26 = arith.cmpf oeq, %22, %25 : vector<8x128xf32>
    %cst_21 = arith.constant 0.000000e+00 : f32
    %27 = vector.broadcast %cst_21 : f32 to vector<8x128xf32>
    %28 = arith.select %26, %20, %27 : vector<8x128xi1>, vector<8x128xf32>
    %c0_22 = arith.constant 0 : index
    %c0_23 = arith.constant 0 : index
    %c0_24 = arith.constant 0 : index
    %29 = vector.load %arg5[%c0_22, %c0_23, %c0_24] : memref<1x8x128xf32, #tpu.memory_space<vmem>>, vector<1x8x128xf32>
    %30 = vector.shape_cast %29 : vector<1x8x128xf32> to vector<8x128xf32>
    %31 = vector.shape_cast %28 : vector<8x128xf32> to vector<1x8x128xf32>
    tpu.vector_store %arg5[%c0_22, %c0_23, %c0_24], %31 {strides = array<i32>} : memref<1x8x128xf32, #tpu.memory_space<vmem>>, vector<1x8x128xf32>,
    %c0_25 = arith.constant 0 : index
    %c0_26 = arith.constant 0 : index
    %32 = vector.load %arg8[%c0_25, %c0_26] : memref<8x128xi32, #tpu.memory_space<vmem>>, vector<8x128xi32>
    %33 = arith.extui %24 : vector<8x128xi1> to vector<8x128xi32>
    %34 = arith.addi %32, %33 : vector<8x128xi32>
    %c0_27 = arith.constant 0 : index
    %c0_28 = arith.constant 0 : index
    %35 = vector.load %arg8[%c0_27, %c0_28] : memref<8x128xi32, #tpu.memory_space<vmem>>, vector<8x128xi32>
    tpu.vector_store %arg8[%c0_27, %c0_28], %34 {strides = array<i32>} : memref<8x128xi32, #tpu.memory_space<vmem>>, vector<8x128xi32>,
    %c0_29 = arith.constant 0 : index
    %c0_30 = arith.constant 0 : index
    %36 = vector.load %arg9[%c0_29, %c0_30] : memref<8x128xi32, #tpu.memory_space<vmem>>, vector<8x128xi32>
    %37 = arith.extui %26 : vector<8x128xi1> to vector<8x128xi32>
    %38 = arith.addi %36, %37 : vector<8x128xi32>
    %c0_31 = arith.constant 0 : index
    %c0_32 = arith.constant 0 : index
    %39 = vector.load %arg9[%c0_31, %c0_32] : memref<8x128xi32, #tpu.memory_space<vmem>>, vector<8x128xi32>
    tpu.vector_store %arg9[%c0_31, %c0_32], %38 {strides = array<i32>} : memref<8x128xi32, #tpu.memory_space<vmem>>, vector<8x128xi32>,
    %c0_33 = arith.constant 0 : index
    %c0_34 = arith.constant 0 : index
    %40 = vector.load %arg10[%c0_33, %c0_34] : memref<8x128xf32, #tpu.memory_space<vmem>>, vector<8x128xf32>
    %cst_35 = arith.constant 0.000000e+00 : f32
    %41 = vector.broadcast %cst_35 : f32 to vector<8x128xf32>
    %42 = arith.select %24, %22, %41 : vector<8x128xi1>, vector<8x128xf32>
    %43 = arith.addf %40, %42 : vector<8x128xf32>
    %c0_36 = arith.constant 0 : index
    %c0_37 = arith.constant 0 : index
    %44 = vector.load %arg10[%c0_36, %c0_37] : memref<8x128xf32, #tpu.memory_space<vmem>>, vector<8x128xf32>
    tpu.vector_store %arg10[%c0_36, %c0_37], %43 {strides = array<i32>} : memref<8x128xf32, #tpu.memory_space<vmem>>, vector<8x128xf32>,
    %c0_38 = arith.constant 0 : index
    %c0_39 = arith.constant 0 : index
    %45 = vector.load %arg11[%c0_38, %c0_39] : memref<8x128xf32, #tpu.memory_space<vmem>>, vector<8x128xf32>
    %46 = arith.mulf %20, %22 : vector<8x128xf32>
    %cst_40 = arith.constant 0.000000e+00 : f32
    %47 = vector.broadcast %cst_40 : f32 to vector<8x128xf32>
    %48 = arith.select %24, %46, %47 : vector<8x128xi1>, vector<8x128xf32>
    %49 = arith.addf %45, %48 : vector<8x128xf32>
    %c0_41 = arith.constant 0 : index
    %c0_42 = arith.constant 0 : index
    %50 = vector.load %arg11[%c0_41, %c0_42] : memref<8x128xf32, #tpu.memory_space<vmem>>, vector<8x128xf32>
    tpu.vector_store %arg11[%c0_41, %c0_42], %49 {strides = array<i32>} : memref<8x128xf32, #tpu.memory_space<vmem>>, vector<8x128xf32>,
    %51 = arith.extui %5 : i1 to i32
    %c0_i32_43 = arith.constant 0 : i32
    %52 = arith.cmpi ne, %51, %c0_i32_43 : i32
    scf.if %52 {
      %c0_44 = arith.constant 0 : index
      %c0_45 = arith.constant 0 : index
      %53 = vector.load %arg8[%c0_44, %c0_45] : memref<8x128xi32, #tpu.memory_space<vmem>>, vector<8x128xi32>
      %54 = vector.shape_cast %53 : vector<8x128xi32> to vector<1x8x128xi32>
      %cst_46 = arith.constant dense<0> : vector<1xi32>
      %55 = vector.multi_reduction <add>, %54, %cst_46 [1, 2] : vector<1x8x128xi32> to vector<1xi32>
      %56 = vector.shape_cast %55 : vector<1xi32> to vector<1x1x1xi32>
      %57 = vector.extract %56[0, 0, 0] : i32 from vector<1x1x1xi32>
      %c0_47 = arith.constant 0 : index
      %58 = memref.load %arg6[%c0_47] : memref<2xi32, #tpu.memory_space<smem>>
      memref.store %57, %arg6[%c0_47] : memref<2xi32, #tpu.memory_space<smem>>
      %c0_48 = arith.constant 0 : index
      %c0_49 = arith.constant 0 : index
      %59 = vector.load %arg9[%c0_48, %c0_49] : memref<8x128xi32, #tpu.memory_space<vmem>>, vector<8x128xi32>
      %60 = vector.shape_cast %59 : vector<8x128xi32> to vector<1x8x128xi32>
      %cst_50 = arith.constant dense<0> : vector<1xi32>
      %61 = vector.multi_reduction <add>, %60, %cst_50 [1, 2] : vector<1x8x128xi32> to vector<1xi32>
      %62 = vector.shape_cast %61 : vector<1xi32> to vector<1x1x1xi32>
      %63 = vector.extract %62[0, 0, 0] : i32 from vector<1x1x1xi32>
      %c1_51 = arith.constant 1 : index
      %64 = memref.load %arg6[%c1_51] : memref<2xi32, #tpu.memory_space<smem>>
      memref.store %63, %arg6[%c1_51] : memref<2xi32, #tpu.memory_space<smem>>
      %c0_52 = arith.constant 0 : index
      %c0_53 = arith.constant 0 : index
      %65 = vector.load %arg10[%c0_52, %c0_53] : memref<8x128xf32, #tpu.memory_space<vmem>>, vector<8x128xf32>
      %66 = vector.shape_cast %65 : vector<8x128xf32> to vector<1x8x128xf32>
      %cst_54 = arith.constant dense<0.000000e+00> : vector<1xf32>
      %67 = vector.multi_reduction <add>, %66, %cst_54 [1, 2] : vector<1x8x128xf32> to vector<1xf32>
      %68 = vector.shape_cast %67 : vector<1xf32> to vector<1x1x1xf32>
      %69 = vector.extract %68[0, 0, 0] : f32 from vector<1x1x1xf32>
      %c0_55 = arith.constant 0 : index
      %70 = memref.load %arg7[%c0_55] : memref<2xf32, #tpu.memory_space<smem>>
      memref.store %69, %arg7[%c0_55] : memref<2xf32, #tpu.memory_space<smem>>
      %c0_56 = arith.constant 0 : index
      %c0_57 = arith.constant 0 : index
      %71 = vector.load %arg11[%c0_56, %c0_57] : memref<8x128xf32, #tpu.memory_space<vmem>>, vector<8x128xf32>
      %72 = vector.shape_cast %71 : vector<8x128xf32> to vector<1x8x128xf32>
      %cst_58 = arith.constant dense<0.000000e+00> : vector<1xf32>
      %73 = vector.multi_reduction <add>, %72, %cst_58 [1, 2] : vector<1x8x128xf32> to vector<1xf32>
      %74 = vector.shape_cast %73 : vector<1xf32> to vector<1x1x1xf32>
      %75 = vector.extract %74[0, 0, 0] : f32 from vector<1x1x1xf32>
      %c1_59 = arith.constant 1 : index
      %76 = memref.load %arg7[%c1_59] : memref<2xf32, #tpu.memory_space<smem>>
      memref.store %75, %arg7[%c1_59] : memref<2xf32, #tpu.memory_space<smem>>
    } else {
    }
    return
  }
  func.func @transform_0(%arg0: i32, %arg1: i32) -> (i32, i32, i32, i32) {
    %c0_i32 = arith.constant 0 : i32
    %c0_i32_0 = arith.constant 0 : i32
    %c0_i32_1 = arith.constant 0 : i32
    return %arg0, %c0_i32, %arg1, %c0_i32_0 : i32, i32, i32, i32
  }
  func.func @transform_1(%arg0: i32, %arg1: i32) -> (i32, i32, i32, i32) {
    %c0_i32 = arith.constant 0 : i32
    %c0_i32_0 = arith.constant 0 : i32
    %c0_i32_1 = arith.constant 0 : i32
    return %arg0, %c0_i32, %arg1, %c0_i32_0 : i32, i32, i32, i32
  }
  func.func @transform_2(%arg0: i32, %arg1: i32) -> (i32, i32, i32) {
    %c0_i32 = arith.constant 0 : i32
    %c0_i32_0 = arith.constant 0 : i32
    return %arg0, %arg1, %c0_i32 : i32, i32, i32
  }
  func.func @transform_3(%arg0: i32, %arg1: i32) -> (i32, i32, i32) {
    %c0_i32 = arith.constant 0 : i32
    %c0_i32_0 = arith.constant 0 : i32
    return %arg0, %arg1, %c0_i32 : i32, i32, i32
  }
  func.func @transform_4(%arg0: i32, %arg1: i32) -> i32 {
    %c0_i32 = arith.constant 0 : i32
    %c0_i32_0 = arith.constant 0 : i32
    return %c0_i32 : i32
  }
  func.func @transform_5(%arg0: i32, %arg1: i32) -> i32 {
    %c0_i32 = arith.constant 0 : i32
    %c0_i32_0 = arith.constant 0 : i32
    return %c0_i32 : i32
  }
}

</mosaic_0001>

<llo_original>
// kernel: tpu_custom_call.1
$region0: #{tpu_custom_call.1}
  #allocation0 [shape = 'u32[]', space=smem, size = 0x4, offset = 0x4, fixed_abs, tag = 'smem constant byte address 0x4 - core index']
  #allocation1 [shape = 'u32[144,128]{1,0:T(1,128)}', space=vmem, size = 0x12000, scoped, tag = 'internal scratch']
  #allocation2 [shape = 's32[8,128]{1,0:T(8,128)}', space=vmem, size = 0x1000, scoped, tag = 'scratch operand']
  #allocation3 [shape = 's32[8,128]{1,0:T(8,128)}', space=vmem, size = 0x1000, scoped, tag = 'scratch operand']
  #allocation4 [shape = 'f32[8,128]{1,0:T(8,128)}', space=vmem, size = 0x1000, scoped, tag = 'scratch operand']
  #allocation5 [shape = 'f32[8,128]{1,0:T(8,128)}', space=vmem, size = 0x1000, scoped, tag = 'scratch operand']
  %s0 = inlined_call_operand.hbm [shape: f32[2,2,8,128], index: 0, kind: input, shape index: {}]
  %s1 = inlined_call_operand.hbm [shape: f32[2,2,8,128], index: 1, kind: input, shape index: {}]
  %s2 = inlined_call_operand.hbm [shape: f32[2,8,128], index: 2, kind: input, shape index: {}]
  %s3 = inlined_call_operand.hbm [shape: f32[2,8,128], index: 3, kind: output, shape index: {0}]
  %s4 = inlined_call_operand.hbm [shape: s32[2], index: 4, kind: output, shape index: {1}]
  %s5 = inlined_call_operand.hbm [shape: f32[2], index: 5, kind: output, shape index: {2}]
  %6 = xla_tuple %s3, %s4, %s5
  %s7 = sld [smem:[#allocation0]]
  $region81: #{tpu_custom_call.1} parent=0
    _
  %s9 = ssub.s32 1, %s7
  %s10 = scalar_select 0, %s9, %s7
  $region1: #{tpu_custom_call.1} parent=0
    #allocation6 [shape = 'u8[16384]{0}', space=vmem, size = 0x4000, scoped, tag = 'input window, operand 0']
    #allocation7 [shape = 's32[2]{0}', space=sflag, size = 0x8, scoped, tag = 'scoped memory for tpu_custom_call.1']
    #allocation8 [shape = 's32[2]{0}', space=sflag, size = 0x8, scoped, tag = 'scoped memory for tpu_custom_call.1']
    #allocation9 [shape = 's32[2]{0}', space=sflag, size = 0x8, scoped, tag = 'scoped memory for tpu_custom_call.1']
    #allocation10 [shape = 'u8[16384]{0}', space=vmem, size = 0x4000, scoped, tag = 'input window, operand 1']
    #allocation11 [shape = 's32[2]{0}', space=sflag, size = 0x8, scoped, tag = 'scoped memory for tpu_custom_call.1']
    #allocation12 [shape = 'u8[8192]{0}', space=vmem, size = 0x2000, scoped, tag = 'input window, operand 2']
    #allocation13 [shape = 'u8[8192]{0}', space=vmem, size = 0x2000, scoped, tag = 'output window, operand 0']
    #allocation14 [shape = 'u8[512]{0}', space=smem, size = 0x200, scoped, tag = 'output window, operand 1, single buffered']
    #allocation15 [shape = 'u8[512]{0}', space=smem, size = 0x200, scoped, tag = 'output window, operand 2, single buffered']
    #allocation16 [shape = 's32[1]{0}', space=sflag, size = 0x4, scoped, tag = 'scoped memory for tpu_custom_call.1']
    %11 = vsyncpa [#allocation7], 0
    %s12 = scalar_lea.sflag [#allocation7], 1
    %13 = vsyncpa %s12, 0
    %14 = vsyncpa [#allocation11], 0
    %s15 = scalar_lea.sflag [#allocation11], 1
    %16 = vsyncpa %s15, 0
    %17 = vsyncpa [#allocation8], 0
    %s18 = scalar_lea.sflag [#allocation8], 1
    %19 = vsyncpa %s18, 0
    %20 = vsyncpa [#allocation9], 0
    %21 = vsyncpa [#allocation16], 0
    loop: start=0, step=1, limit=4
    $region2: #{tpu_custom_call.1} parent=1 // loop_pre_header
      _
    $region3: #{tpu_custom_call.1} parent=1 // loop_header
      %s23 = sphi 0, %s27
      %p24 = scmp.ge.s32.totalorder %s23, 4
      %s30 = sphi 0, %s42
      %s31 = sphi 0, %s38
      %s32 = sphi 0, %s30
      %s33 = sphi 0, %s31
      %s34 = sphi 0, %s32
      %s35 = sphi 0, %s33
      %s47 = sphi 0, %s49
      %s50 = sphi 0, %s47
      %s51 = sphi 0, %s50
      %s67 = sphi 0, %s51
      %s75 = sphi 0, %s77
      %s78 = sphi 0, %s75
      %s79 = sphi 0, %s78
      %s95 = sphi 0, %s79
      %s103 = sphi 0, %s105
      %s106 = sphi 0, %s103
      %s107 = sphi 0, %s106
      %s123 = sphi 0, %s107
      %s131 = sphi 0, %s133
      %s134 = sphi 0, %s131
      %s135 = sphi 0, %s134
      %s151 = sphi 0, %s135
      %s155 = sphi 0, %s155
      %s157 = sphi 0, %s155
      %s158 = sphi 0, %s157
      %s172 = sphi 0, %s158
      %s176 = sphi 0, %s176
      %s178 = sphi 0, %s176
      %s179 = sphi 0, %s178
      %s193 = sphi 0, %s179
    $region4: #{tpu_custom_call.1} parent=1 // loop_header_branch
      %26 = sbr.rel (%p24) target = $region8
    $region5: #{tpu_custom_call.1} parent=1 // loop_body
      %s28 = ssub.s32 %s23, 1
      %s29 = ssub.s32 %s23, 2
      %s36 = sadd.s32 1, %s31
      %p37 = scmp.ge.s32.totalorder %s36, 1
      %s38 = scalar_select %p37, 0, %s36
      %s39 = sadd.s32 1, %s30
      %s40 = scalar_select %p37, %s39, %s30
      %p41 = scmp.ge.s32.totalorder %s40, 2
      %s42 = scalar_select %p41, 0, %s40
      %s43 = ssub.s32 %s30, %s42
      %s44 = ssub.s32 %s31, %s38
      %s45 = sor.u32 %s43, %s44
      %p46 = scmp.eq.s32.totalorder %s45, 0
      %s48 = sadd.s32 %s47, 1
      %s49 = scalar_select %p46, %s47, %s48
      %p52 = pneg %p46
      %p53 = scmp.eq.s32.totalorder %s23, 1
      %p54 = por %p52, %p53
      %p55 = scmp.ne.s32.totalorder %s47, %s50
      %p56 = scmp.eq.s32.totalorder %s23, 0
      %p57 = por %p55, %p56
      %p58 = scmp.ne.s32.totalorder %s47, %s50
      %p59 = scmp.eq.s32.totalorder %s28, 1
      %p60 = por %p58, %p59
      %p61 = scmp.ne.s32.totalorder %s50, %s51
      %p62 = scmp.eq.s32.totalorder %s28, 0
      %p63 = por %p61, %p62
      %p64 = scmp.ne.s32.totalorder %s50, %s51
      %p65 = scmp.eq.s32.totalorder %s29, 1
      %p66 = por %p64, %p65
      %p68 = scmp.ne.s32.totalorder %s51, %s67
      %p69 = scmp.eq.s32.totalorder %s29, 0
      %p70 = por %p68, %p69
      %s71 = ssub.s32 %s30, %s42
      %s72 = ssub.s32 %s31, %s38
      %s73 = sor.u32 %s71, %s72
      %p74 = scmp.eq.s32.totalorder %s73, 0
      %s76 = sadd.s32 %s75, 1
      %s77 = scalar_select %p74, %s75, %s76
      %p80 = pneg %p74
      %p81 = scmp.eq.s32.totalorder %s23, 1
      %p82 = por %p80, %p81
      %p83 = scmp.ne.s32.totalorder %s75, %s78
      %p84 = scmp.eq.s32.totalorder %s23, 0
      %p85 = por %p83, %p84
      %p86 = scmp.ne.s32.totalorder %s75, %s78
      %p87 = scmp.eq.s32.totalorder %s28, 1
      %p88 = por %p86, %p87
      %p89 = scmp.ne.s32.totalorder %s78, %s79
      %p90 = scmp.eq.s32.totalorder %s28, 0
      %p91 = por %p89, %p90
      %p92 = scmp.ne.s32.totalorder %s78, %s79
      %p93 = scmp.eq.s32.totalorder %s29, 1
      %p94 = por %p92, %p93
      %p96 = scmp.ne.s32.totalorder %s79, %s95
      %p97 = scmp.eq.s32.totalorder %s29, 0
      %p98 = por %p96, %p97
      %s99 = ssub.s32 %s30, %s42
      %s100 = ssub.s32 %s31, %s38
      %s101 = sor.u32 %s99, %s100
      %p102 = scmp.eq.s32.totalorder %s101, 0
      %s104 = sadd.s32 %s103, 1
      %s105 = scalar_select %p102, %s103, %s104
      %p108 = pneg %p102
      %p109 = scmp.eq.s32.totalorder %s23, 1
      %p110 = por %p108, %p109
      %p111 = scmp.ne.s32.totalorder %s103, %s106
      %p112 = scmp.eq.s32.totalorder %s23, 0
      %p113 = por %p111, %p112
      %p114 = scmp.ne.s32.totalorder %s103, %s106
      %p115 = scmp.eq.s32.totalorder %s28, 1
      %p116 = por %p114, %p115
      %p117 = scmp.ne.s32.totalorder %s106, %s107
      %p118 = scmp.eq.s32.totalorder %s28, 0
      %p119 = por %p117, %p118
      %p120 = scmp.ne.s32.totalorder %s106, %s107
      %p121 = scmp.eq.s32.totalorder %s29, 1
      %p122 = por %p120, %p121
      %p124 = scmp.ne.s32.totalorder %s107, %s123
      %p125 = scmp.eq.s32.totalorder %s29, 0
      %p126 = por %p124, %p125
      %s127 = ssub.s32 %s30, %s42
      %s128 = ssub.s32 %s31, %s38
      %s129 = sor.u32 %s127, %s128
      %p130 = scmp.eq.s32.totalorder %s129, 0
      %s132 = sadd.s32 %s131, 1
      %s133 = scalar_select %p130, %s131, %s132
      %p136 = pneg %p130
      %p137 = scmp.eq.s32.totalorder %s23, 1
      %p138 = por %p136, %p137
      %p139 = scmp.ne.s32.totalorder %s131, %s134
      %p140 = scmp.eq.s32.totalorder %s23, 0
      %p141 = por %p139, %p140
      %p142 = scmp.ne.s32.totalorder %s131, %s134
      %p143 = scmp.eq.s32.totalorder %s28, 1
      %p144 = por %p142, %p143
      %p145 = scmp.ne.s32.totalorder %s134, %s135
      %p146 = scmp.eq.s32.totalorder %s28, 0
      %p147 = por %p145, %p146
      %p148 = scmp.ne.s32.totalorder %s134, %s135
      %p149 = scmp.eq.s32.totalorder %s29, 1
      %p150 = por %p148, %p149
      %p152 = scmp.ne.s32.totalorder %s135, %s151
      %p153 = scmp.eq.s32.totalorder %s29, 0
      %p154 = por %p152, %p153
      %s156 = sadd.s32 %s155, 1
      %p159 = scmp.eq.s32.totalorder %s23, 1
      %p160 = scmp.ne.s32.totalorder %s155, %s157
      %p161 = scmp.eq.s32.totalorder %s23, 0
      %p162 = por %p160, %p161
      %p163 = scmp.ne.s32.totalorder %s155, %s157
      %p164 = scmp.eq.s32.totalorder %s28, 1
      %p165 = por %p163, %p164
      %p166 = scmp.ne.s32.totalorder %s157, %s158
      %p167 = scmp.eq.s32.totalorder %s28, 0
      %p168 = por %p166, %p167
      %p169 = scmp.ne.s32.totalorder %s157, %s158
      %p170 = scmp.eq.s32.totalorder %s29, 1
      %p171 = por %p169, %p170
      %p173 = scmp.ne.s32.totalorder %s158, %s172
      %p174 = scmp.eq.s32.totalorder %s29, 0
      %p175 = por %p173, %p174
      %s177 = sadd.s32 %s176, 1
      %p180 = scmp.eq.s32.totalorder %s23, 1
      %p181 = scmp.ne.s32.totalorder %s176, %s178
      %p182 = scmp.eq.s32.totalorder %s23, 0
      %p183 = por %p181, %p182
      %p184 = scmp.ne.s32.totalorder %s176, %s178
      %p185 = scmp.eq.s32.totalorder %s28, 1
      %p186 = por %p184, %p185
      %p187 = scmp.ne.s32.totalorder %s178, %s179
      %p188 = scmp.eq.s32.totalorder %s28, 0
      %p189 = por %p187, %p188
      %p190 = scmp.ne.s32.totalorder %s178, %s179
      %p191 = scmp.eq.s32.totalorder %s29, 1
      %p192 = por %p190, %p191
      %p194 = scmp.ne.s32.totalorder %s179, %s193
      %p195 = scmp.eq.s32.totalorder %s29, 0
      %p196 = por %p194, %p195
      %p197 = scmp.le.s32.totalorder 1, %s23
      %p198 = scmp.lt.s32.totalorder %s23, 3
      %p199 = pnand %p197, %p198
      %p200 = pneg %p199
      // Predicated region
      $region9: #{tpu_custom_call.1} parent=5 // pred_check
        _
      $region10: #{tpu_custom_call.1} parent=5 // pred_check_branch
        %202 = sbr.rel (%p199) target = $region12
      $region11: #{tpu_custom_call.1} parent=5 // pred_region
        %s203 = ssub.s32 %s23, 1
      $region12: #{tpu_custom_call.1} parent=5 // pred_fallthru
        _
      %p204 = scmp.lt.s32.totalorder %s23, 2
      // Predicated region
      $region13: #{tpu_custom_call.1} parent=5 // pred_check
        %p205 = pneg %p204
      $region14: #{tpu_custom_call.1} parent=5 // pred_check_branch
        %207 = sbr.rel (%p205) target = $region16
      $region15: #{tpu_custom_call.1} parent=5 // pred_region
        // Predicated region
        $region17: #{tpu_custom_call.1} parent=15 // pred_check
          %p208 = pneg %p57
        $region18: #{tpu_custom_call.1} parent=15 // pred_check_branch
          %210 = sbr.rel (%p208) target = $region20
        $region19: #{tpu_custom_call.1} parent=15 // pred_region
          %s211 = sand.u32 %s47, 1
          %s212 = scalar_lea.sflag [#allocation7], %s211
          %s213 = sand.u32 %s47, 1
          %s214 = smul.addr %s213, 16
          %s215 = scalar_lea.vmem [#allocation6], %s214
          %s217 = ssub.s32 256, 256
          %218 = vsyncadd %s212, %s217
          %s219 = smul.addr %s30, 2
          %s220 = sadd.s32 %s31, %s219
          %s221 = smul.addr %s220, 128
          %s222 = scalar_lea.hbm %s0, %s221
          %s223 = sshll.u32 %s215, 4
          %s224 = int_to_ptr.vmem [resolvable:$true] %s223
          %229 = dma.hbm_to_vmem [thread:$0]  %s222, 256, %s224, %s212, 128, 128, 8
        $region20: #{tpu_custom_call.1} parent=15 // pred_fallthru
          _
        // Predicated region
        $region21: #{tpu_custom_call.1} parent=15 // pred_check
          %p230 = pneg %p85
        $region22: #{tpu_custom_call.1} parent=15 // pred_check_branch
          %232 = sbr.rel (%p230) target = $region24
        $region23: #{tpu_custom_call.1} parent=15 // pred_region
          %s233 = sand.u32 %s23, 1
          %s234 = scalar_lea.sflag [#allocation11], %s233
          %s235 = sand.u32 %s75, 1
          %s236 = smul.addr %s235, 16
          %s237 = scalar_lea.vmem [#allocation10], %s236
          %s239 = ssub.s32 256, 256
          %240 = vsyncadd %s234, %s239
          %s241 = smul.addr %s30, 2
          %s242 = sadd.s32 %s31, %s241
          %s243 = smul.addr %s242, 128
          %s244 = scalar_lea.hbm %s1, %s243
          %s245 = sshll.u32 %s237, 4
          %s246 = int_to_ptr.vmem [resolvable:$true] %s245
          %251 = dma.hbm_to_vmem [thread:$0]  %s244, 256, %s246, %s234, 128, 128, 8
        $region24: #{tpu_custom_call.1} parent=15 // pred_fallthru
          _
        // Predicated region
        $region25: #{tpu_custom_call.1} parent=15 // pred_check
          %p252 = pneg %p113
        $region26: #{tpu_custom_call.1} parent=15 // pred_check_branch
          %254 = sbr.rel (%p252) target = $region28
        $region27: #{tpu_custom_call.1} parent=15 // pred_region
          %s255 = sand.u32 %s23, 1
          %s256 = scalar_lea.sflag [#allocation11], %s255
          %s257 = sand.u32 %s103, 1
          %s258 = smul.addr %s257, 8
          %s259 = scalar_lea.vmem [#allocation12], %s258
          %s261 = ssub.s32 128, 128
          %262 = vsyncadd %s256, %s261
          %s263 = sadd.s32 %s31, %s30
          %s264 = smul.addr %s263, 128
          %s265 = scalar_lea.hbm %s2, %s264
          %s267 = sshll.u32 %s259, 4
          %s268 = int_to_ptr.vmem [resolvable:$true] %s267
          %270 = dma.hbm_to_vmem [thread:$0]  %s265, 128, %s268, %s256
        $region28: #{tpu_custom_call.1} parent=15 // pred_fallthru
          _
      $region16: #{tpu_custom_call.1} parent=5 // pred_fallthru
        _
      %p271 = scmp.le.s32.totalorder 1, %s23
      %p272 = scmp.lt.s32.totalorder %s23, 3
      %p273 = pnand %p271, %p272
      %p274 = pneg %p273
      // Predicated region
      $region29: #{tpu_custom_call.1} parent=5 // pred_check
        _
      $region30: #{tpu_custom_call.1} parent=5 // pred_check_branch
        %276 = sbr.rel (%p273) target = $region32
      $region31: #{tpu_custom_call.1} parent=5 // pred_region
        %s277 = ssub.s32 %s23, 1
        %s278 = sand.u32 %s50, 1
        %s279 = scalar_lea.sflag [#allocation7], %s278
        %s280 = sand.u32 %s50, 1
        %s281 = smul.addr %s280, 16
        %s282 = scalar_lea.vmem [#allocation6], %s281
        // Predicated region
        $region33: #{tpu_custom_call.1} parent=31 // pred_check
          %p283 = pneg %p63
        $region34: #{tpu_custom_call.1} parent=31 // pred_check_branch
          %285 = sbr.rel (%p283) target = $region36
        $region35: #{tpu_custom_call.1} parent=31 // pred_region
          %286 = dma.done %s279, 256
        $region36: #{tpu_custom_call.1} parent=31 // pred_fallthru
          _
        %s287 = sand.u32 %s28, 1
        %s288 = scalar_lea.sflag [#allocation11], %s287
        %s289 = sand.u32 %s78, 1
        %s290 = smul.addr %s289, 16
        %s291 = scalar_lea.vmem [#allocation10], %s290
        // Predicated region
        $region37: #{tpu_custom_call.1} parent=31 // pred_check
          %p292 = pneg %p91
        $region38: #{tpu_custom_call.1} parent=31 // pred_check_branch
          %294 = sbr.rel (%p292) target = $region40
        $region39: #{tpu_custom_call.1} parent=31 // pred_region
          %295 = dma.done %s288, 256
        $region40: #{tpu_custom_call.1} parent=31 // pred_fallthru
          _
        %s296 = sand.u32 %s28, 1
        %s297 = scalar_lea.sflag [#allocation11], %s296
        %s298 = sand.u32 %s106, 1
        %s299 = smul.addr %s298, 8
        %s300 = scalar_lea.vmem [#allocation12], %s299
        // Predicated region
        $region41: #{tpu_custom_call.1} parent=31 // pred_check
          %p301 = pneg %p119
        $region42: #{tpu_custom_call.1} parent=31 // pred_check_branch
          %303 = sbr.rel (%p301) target = $region44
        $region43: #{tpu_custom_call.1} parent=31 // pred_region
          %304 = dma.done %s297, 128
        $region44: #{tpu_custom_call.1} parent=31 // pred_fallthru
          _
        %s305 = sand.u32 %s50, 1
        %s306 = scalar_lea.sflag [#allocation7], %s305
        %s307 = sand.u32 %s50, 1
        %s308 = smul.addr %s307, 16
        %s309 = scalar_lea.vmem [#allocation6], %s308
        %p310 = pneg %p63
        %p311 = pneg %p60
        %s312 = sand.u32 %s28, 1
        %s313 = scalar_lea.sflag [#allocation11], %s312
        %s314 = sand.u32 %s78, 1
        %s315 = smul.addr %s314, 16
        %s316 = scalar_lea.vmem [#allocation10], %s315
        %p317 = pneg %p91
        %p318 = pneg %p88
        %s319 = sand.u32 %s28, 1
        %s320 = scalar_lea.sflag [#allocation11], %s319
        %s321 = sand.u32 %s106, 1
        %s322 = smul.addr %s321, 8
        %s323 = scalar_lea.vmem [#allocation12], %s322
        %p324 = pneg %p119
        %p325 = pneg %p116
        %p326 = pneg %p147
        %p327 = pneg %p144
        %s328 = sand.u32 %s134, 1
        %s329 = scalar_lea.sflag [#allocation8], %s328
        %s330 = sand.u32 %s134, 1
        %s331 = smul.addr %s330, 8
        %s332 = scalar_lea.vmem [#allocation13], %s331
        %p333 = pneg %p168
        %p334 = pneg %p165
        %p335 = pneg %p189
        %p336 = pneg %p186
        %p337 = scmp.eq.s32.totalorder %s32, 0
        %p338 = scmp.eq.s32.totalorder %s33, 0
        %p339 = pnand %p337, %p338
        %p340 = pneg %p339
        %p341 = scmp.eq.s32.totalorder %s32, 1
        %p342 = pnand %p341, %p338
        %p343 = pneg %p342
        // Predicated region
        $region45: #{tpu_custom_call.1} parent=31 // pred_check
          _
        $region46: #{tpu_custom_call.1} parent=31 // pred_check_branch
          %345 = sbr.rel (%p339) target = $region48
        $region47: #{tpu_custom_call.1} parent=31 // pred_region
          %346 = vst [vmem:[#allocation2] sm:$0xff] 0
          %347 = vst [vmem:[#allocation3] sm:$0xff] 0
          %348 = vst [vmem:[#allocation4] sm:$0xff] 0.0
          %349 = vst [vmem:[#allocation5] sm:$0xff] 0.0
        $region48: #{tpu_custom_call.1} parent=31 // pred_fallthru
          _
        %v350 = vld [vmem:[%s282] sm:$0xff]
        %v351 = vld [vmem:[%s291] sm:$0xff]
        %v352 = vsub.f32 %v350, %v351
        %s353 = scalar_lea.vmem %s282, 8 [#allocation6]
        %v354 = vld [vmem:[%s353] sm:$0xff]
        %s355 = scalar_lea.vmem %s291, 8 [#allocation10]
        %v356 = vld [vmem:[%s355] sm:$0xff]
        %v357 = vsub.f32 %v354, %v356
        %v358 = vmul.f32 %v352, %v352
        %v359 = vmul.f32 %v357, %v357
        %v360 = vadd.f32 %v358, %v359
        %v361 = vld [vmem:[%s300] sm:$0xff]
        %vm362 = vcmp.gt.f32.partialorder %v361, 0.0
        %vm363 = vcmp.eq.f32.partialorder %v361, 0.0
        %v364 = vsel %vm363, %v360, 0.0
        %365 = vst [vmem:[%s332] sm:$0xff] %v364
        %v366 = vld [vmem:[#allocation2] sm:$0xff]
        %v367 = vsel %vm362, 1, 0
        %v368 = vadd.s32 %v366, %v367
        %369 = vst [vmem:[#allocation2] sm:$0xff] %v368
        %v370 = vld [vmem:[#allocation3] sm:$0xff]
        %v371 = vsel %vm363, 1, 0
        %v372 = vadd.s32 %v370, %v371
        %373 = vst [vmem:[#allocation3] sm:$0xff] %v372
        %v374 = vld [vmem:[#allocation4] sm:$0xff]
        %v375 = vsel %vm362, %v361, 0.0
        %v376 = vadd.f32 %v374, %v375
        %377 = vst [vmem:[#allocation4] sm:$0xff] %v376
        %v378 = vld [vmem:[#allocation5] sm:$0xff]
        %v379 = vmul.f32 %v360, %v361
        %v380 = vsel %vm362, %v379, 0.0
        %v381 = vadd.f32 %v378, %v380
        %382 = vst [vmem:[#allocation5] sm:$0xff] %v381
        // Predicated region
        $region49: #{tpu_custom_call.1} parent=31 // pred_check
          _
        $region50: #{tpu_custom_call.1} parent=31 // pred_check_branch
          %384 = sbr.rel (%p342) target = $region52
        $region51: #{tpu_custom_call.1} parent=31 // pred_region
          %v385 = vld [vmem:[#allocation2] sm:$0xff]
          %v386 = vand.u32 %v385, 65535
          %v387 = vshrl.u32 %v385, 16
          %v388 = vcvt.s32.f32 %v386
          %v389 = vcvt.s32.f32 %v387
          %390 = vadd.xlane.f32.xlu0 %v388
          %v391 = vpop.xlane.xlu0 %390
          %392 = vadd.xlane.f32.xlu0 %v389
          %v393 = vpop.xlane.xlu0 %392
          %v394 = vcvt.f32.s32 %v391
          %v395 = vcvt.f32.s32 %v393
          %v396 = vshll.u32 %v395, 16
          %v397 = vadd.s32 %v396, %v394
          %v398 = vrot.slane %v397, 4
          %v399 = vadd.s32 %v397, %v398
          %v400 = vrot.slane %v399, 2
          %v401 = vadd.s32 %v399, %v400
          %v402 = vrot.slane %v401, 1
          %v403 = vadd.s32 %v401, %v402
          %s404 = vtos %v403
          %s405 = scalar_lea.smem [#allocation14], 0
          %406 = sst [smem:[%s405]] %s404
          %v407 = vld [vmem:[#allocation3] sm:$0xff]
          %v408 = vand.u32 %v407, 65535
          %v409 = vshrl.u32 %v407, 16
          %v410 = vcvt.s32.f32 %v408
          %v411 = vcvt.s32.f32 %v409
          %412 = vadd.xlane.f32.xlu0 %v410
          %v413 = vpop.xlane.xlu0 %412
          %414 = vadd.xlane.f32.xlu0 %v411
          %v415 = vpop.xlane.xlu0 %414
          %v416 = vcvt.f32.s32 %v413
          %v417 = vcvt.f32.s32 %v415
          %v418 = vshll.u32 %v417, 16
          %v419 = vadd.s32 %v418, %v416
          %v420 = vrot.slane %v419, 4
          %v421 = vadd.s32 %v419, %v420
          %v422 = vrot.slane %v421, 2
          %v423 = vadd.s32 %v421, %v422
          %v424 = vrot.slane %v423, 1
          %v425 = vadd.s32 %v423, %v424
          %s426 = vtos %v425
          %s427 = scalar_lea.smem [#allocation14], 1
          %428 = sst [smem:[%s427]] %s426
          %v429 = vld [vmem:[#allocation4] sm:$0xff]
          %430 = vadd.xlane.f32.xlu0 %v429
          %v431 = vpop.xlane.xlu0 %430
          %v432 = vrot.slane %v431, 4
          %v433 = vadd.f32 %v431, %v432
          %v434 = vrot.slane %v433, 2
          %v435 = vadd.f32 %v433, %v434
          %v436 = vrot.slane %v435, 1
          %v437 = vadd.f32 %v435, %v436
          %s438 = vtos %v437
          %s439 = scalar_lea.smem [#allocation15], 0
          %440 = sst [smem:[%s439]] %s438
          %v441 = vld [vmem:[#allocation5] sm:$0xff]
          %442 = vadd.xlane.f32.xlu0 %v441
          %v443 = vpop.xlane.xlu0 %442
          %v444 = vrot.slane %v443, 4
          %v445 = vadd.f32 %v443, %v444
          %v446 = vrot.slane %v445, 2
          %v447 = vadd.f32 %v445, %v446
          %v448 = vrot.slane %v447, 1
          %v449 = vadd.f32 %v447, %v448
          %s450 = vtos %v449
          %s451 = scalar_lea.smem [#allocation15], 1
          %452 = sst [smem:[%s451]] %s450
        $region52: #{tpu_custom_call.1} parent=31 // pred_fallthru
          _
        %s453 = sand.u32 %s134, 1
        %s454 = scalar_lea.sflag [#allocation8], %s453
        %s455 = sand.u32 %s134, 1
        %s456 = smul.addr %s455, 8
        %s457 = scalar_lea.vmem [#allocation13], %s456
        // Predicated region
        $region53: #{tpu_custom_call.1} parent=31 // pred_check
          %p458 = pneg %p144
        $region54: #{tpu_custom_call.1} parent=31 // pred_check_branch
          %460 = sbr.rel (%p458) target = $region56
        $region55: #{tpu_custom_call.1} parent=31 // pred_region
          %s462 = ssub.s32 128, 128
          %463 = vsyncadd %s454, %s462
          %s464 = sadd.s32 %s33, %s32
          %s465 = smul.addr %s464, 128
          %s466 = scalar_lea.hbm %s3, %s465
          %s468 = sshll.u32 %s457, 4
          %s469 = int_to_ptr.vmem [resolvable:$true] %s468
          %471 = dma.vmem_to_hbm [thread:$0]  %s469, 128, %s466, %s454
        $region56: #{tpu_custom_call.1} parent=31 // pred_fallthru
          _
        // Predicated region
        $region57: #{tpu_custom_call.1} parent=31 // pred_check
          %p472 = pneg %p165
        $region58: #{tpu_custom_call.1} parent=31 // pred_check_branch
          %474 = sbr.rel (%p472) target = $region60
        $region59: #{tpu_custom_call.1} parent=31 // pred_region
          %s476 = ssub.s32 16, 16
          %477 = vsyncadd [#allocation9], %s476
          %480 = dma.smem_to_hbm [#allocation14], 16, %s4, [#allocation9]
        $region60: #{tpu_custom_call.1} parent=31 // pred_fallthru
          _
        // Predicated region
        $region61: #{tpu_custom_call.1} parent=31 // pred_check
          %p481 = pneg %p186
        $region62: #{tpu_custom_call.1} parent=31 // pred_check_branch
          %483 = sbr.rel (%p481) target = $region64
        $region63: #{tpu_custom_call.1} parent=31 // pred_region
          %s485 = ssub.s32 16, 16
          %486 = vsyncadd [#allocation16], %s485
          %489 = dma.smem_to_hbm [#allocation15], 16, %s5, [#allocation16]
        $region64: #{tpu_custom_call.1} parent=31 // pred_fallthru
          _
        // Predicated region
        $region65: #{tpu_custom_call.1} parent=31 // pred_check
          %p490 = pneg %p165
        $region66: #{tpu_custom_call.1} parent=31 // pred_check_branch
          %492 = sbr.rel (%p490) target = $region68
        $region67: #{tpu_custom_call.1} parent=31 // pred_region
          %493 = dma.done [#allocation9], 16
        $region68: #{tpu_custom_call.1} parent=31 // pred_fallthru
          _
        // Predicated region
        $region69: #{tpu_custom_call.1} parent=31 // pred_check
          %p494 = pneg %p186
        $region70: #{tpu_custom_call.1} parent=31 // pred_check_branch
          %496 = sbr.rel (%p494) target = $region72
        $region71: #{tpu_custom_call.1} parent=31 // pred_region
          %497 = dma.done [#allocation16], 16
        $region72: #{tpu_custom_call.1} parent=31 // pred_fallthru
          _
        %498 = sfence
      $region32: #{tpu_custom_call.1} parent=5 // pred_fallthru
        _
      %p499 = scmp.le.s32.totalorder 2, %s23
      // Predicated region
      $region73: #{tpu_custom_call.1} parent=5 // pred_check
        %p500 = pneg %p499
      $region74: #{tpu_custom_call.1} parent=5 // pred_check_branch
        %502 = sbr.rel (%p500) target = $region76
      $region75: #{tpu_custom_call.1} parent=5 // pred_region
        %s503 = ssub.s32 %s23, 2
        // Predicated region
        $region77: #{tpu_custom_call.1} parent=75 // pred_check
          %p504 = pneg %p150
        $region78: #{tpu_custom_call.1} parent=75 // pred_check_branch
          %506 = sbr.rel (%p504) target = $region80
        $region79: #{tpu_custom_call.1} parent=75 // pred_region
          %s507 = sand.u32 %s135, 1
          %s508 = scalar_lea.sflag [#allocation8], %s507
          %s509 = sand.u32 %s135, 1
          %s510 = smul.addr %s509, 8
          %s511 = scalar_lea.vmem [#allocation13], %s510
          %512 = dma.done %s508, 128
        $region80: #{tpu_custom_call.1} parent=75 // pred_fallthru
          _
      $region76: #{tpu_custom_call.1} parent=5 // pred_fallthru
        _
    $region6: #{tpu_custom_call.1} parent=1 // loop_footer
      %s27 = sadd.s32 1, %s23
    $region7: #{tpu_custom_call.1} parent=1 // loop_footer_branch
      %22 = sbr.rel target = $region3
    $region8: #{tpu_custom_call.1} parent=1 // loop_exit
      _
    %513 = vsyncpa [#allocation7], 1
    %s514 = scalar_lea.sflag [#allocation7], 1
    %515 = vsyncpa %s514, 1
    %516 = vsyncpa [#allocation11], 1
    %s517 = scalar_lea.sflag [#allocation11], 1
    %518 = vsyncpa %s517, 1
    %519 = vsyncpa [#allocation8], 1
    %s520 = scalar_lea.sflag [#allocation8], 1
    %521 = vsyncpa %s520, 1
    %522 = vsyncpa [#allocation9], 1
    %s523 = scalar_lea.sflag [#allocation9], 1
    %524 = vsyncpa %s523, 1
    %525 = vsyncpa [#allocation16], 1

</llo_original>
